<compile_context>
chip_gen: v7x
topology: tpu7x:2x2x1
jax: 0.10.0
libtpu: 0.0.40
codegen_flags: <defaults>
</compile_context>

<pallas_src>
import functools

import jax
import jax.numpy as jnp
from jax.experimental import pallas as pl
from jax.experimental.pallas import tpu as pltpu


def _focal_dice_kernel(x_ref, t_ref, out_ref, acc_ref, *,
                       s_valid, tile_s, smooth, gamma, mask_tail):
    s = pl.program_id(1)

    # Per-batch-element accumulator init (runs once per b, on whichever core owns b).
    @pl.when(s == 0)
    def _init():
        acc_ref[...] = jnp.zeros_like(acc_ref)

    x = x_ref[0].astype(jnp.float32)        # (C, TS): classes on sublanes, spatial on lanes
    t = t_ref[0].astype(jnp.int32)          # (1, TS) class indices
    c, ts = x.shape

    # Numerically-stable softmax pieces over the class (sublane) axis.
    m = jnp.max(x, axis=0, keepdims=True)               # (1, TS)
    e = jnp.exp(x - m)                                   # (C, TS)  (EUP)
    denom = jnp.sum(e, axis=0, keepdims=True)            # (1, TS)

    # One-hot gather of the target-class exponent via sublane iota
    # (no dynamic gather on TPU).
    cls = jax.lax.broadcasted_iota(jnp.int32, (c, ts), 0)
    e_t = jnp.sum(jnp.where(cls == t, e, 0.0), axis=0, keepdims=True)   # (1, TS)

    # p_t = e_t / denom, with the divide done as EUP approx reciprocal + one Newton
    # refinement (relative error ~eps^2 of the hw approx -> far below 1e-6).
    r = pl.reciprocal(denom, approx=True)
    r = r * (2.0 - denom * r)
    p_t = e_t * r                                         # (1, TS)

    # softmax sums to 1 and the one-hot target sums to 1 -> constant dice denominator.
    inv_den = jnp.float32(1.0 / (2.0 + smooth))
    dice = 1.0 - (2.0 * p_t + jnp.float32(smooth)) * inv_den   # (1, TS)
    pt = jnp.exp(-dice)
    one_minus_pt = 1.0 - pt
    if gamma == 2.0:
        focal = one_minus_pt * one_minus_pt * dice   # VALU mults, no EUP pow
    else:
        focal = jnp.power(one_minus_pt, jnp.float32(gamma)) * dice

    # Mask the ragged spatial tail (emitted only when S % ts != 0; a select, so any
    # NaN/Inf from the undefined OOB tail of the last block cannot leak into the sum).
    if mask_tail:
        col = s * tile_s + jax.lax.broadcasted_iota(jnp.int32, (1, ts), 1)
        focal = jnp.where(col < s_valid, focal, 0.0)

    # Lane-wise running partial sums (pure VALU add; no per-tile cross-lane reduce).
    acc_ref[...] += focal

    @pl.when(s == pl.num_programs(1) - 1)
    def _finalize():
        total = jnp.sum(acc_ref[...])                    # single XLU reduce per b
        out_ref[...] = jnp.broadcast_to(total, out_ref.shape).astype(jnp.float32)


def focal_dice_loss_multi(logits, target, *, smooth=1.0, gamma=2.0,
                          tile_spatial=None):
    """logits: (B, C, H, W) float32/bfloat16; target: (B, H, W) int class indices.

    Returns the scalar mean focal-dice loss (float32).  Passing bf16 logits halves
    the dominant HBM term; the kernel upcasts in-register.
    """
    B, C, H, W = logits.shape
    S = H * W
    N = B * S  # pixels averaged by reduction='mean'

    # Contiguous (free) reshapes: classes stay on the second axis, spatial flattens last.
    x = logits.reshape(B, C, S)
    tgt_dtype = jnp.int8 if C < 128 else jnp.int32
    t = target.reshape(B, 1, S).astype(tgt_dtype)

    # Lane-dense spatial tile sized so a sublane-padded logits block is ~2 MiB/buffer.
    if tile_spatial is None:
        c_pad = ((max(C, 8) + 7) // 8) * 8
        ts = (2 * 1024 * 1024) // (c_pad * 4)
        ts = min(ts, 65536)
    else:
        ts = int(tile_spatial)
    ts = max(128, (ts // 128) * 128)
    if S >= 128:
        ts = min(ts, (S // 128) * 128)   # keep ts a multiple of 128, never pad HBM
    else:
        ts = S                           # block == full (tiny) spatial dim

    num_s_tiles = pl.cdiv(S, ts)
    mask_tail = (S % ts) != 0

    kernel = functools.partial(
        _focal_dice_kernel,
        s_valid=S, tile_s=ts,
        smooth=float(smooth), gamma=float(gamma), mask_tail=mask_tail)

    partials = pl.pallas_call(
        kernel,
        out_shape=jax.ShapeDtypeStruct((B, 8, 128), jnp.float32),
        grid=(B, num_s_tiles),
        in_specs=[
            pl.BlockSpec((1, C, ts), lambda b, s: (b, 0, s)),
            pl.BlockSpec((1, 1, ts), lambda b, s: (b, 0, s)),
        ],
        out_specs=pl.BlockSpec((1, 8, 128), lambda b, s: (b, 0, 0)),
        scratch_shapes=[pltpu.VMEM((1, ts), jnp.float32)],
        compiler_params=pltpu.CompilerParams(
            # b: independent per-batch partials (lets v7x's 2 TCs split the work);
            # s: carried accumulator -> reduction semantics.
            dimension_semantics=("parallel", "arbitrary"),
            vmem_limit_bytes=32 * 1024 * 1024,
        ),
    )(x, t)

    return jnp.sum(partials[:, 0, 0]) / jnp.float32(N)


def focal_dice_loss_multi_ref(logits, target, smooth=1.0, gamma=2.0):
    """Pure-JAX reference: literal translation of the PyTorch forward."""
    p = jax.nn.softmax(logits.astype(jnp.float32), axis=1)   # (B, C, H, W)
    p = jnp.transpose(p, (0, 2, 3, 1))                       # (B, H, W, C)
    onehot = jax.nn.one_hot(target, p.shape[-1], dtype=p.dtype)
    intersection = jnp.sum(p * onehot, axis=-1)
    dice = 1.0 - (2.0 * intersection + smooth) / (
        jnp.sum(p, axis=-1) + jnp.sum(onehot, axis=-1) + smooth)
    pt = jnp.exp(-dice)
    return jnp.mean((1.0 - pt) ** gamma * dice)


if __name__ == "__main__":
    key = jax.random.PRNGKey(0)
    k1, k2 = jax.random.split(key)
    B, C, H, W = 2, 4, 16, 16
    logits = jax.random.normal(k1, (B, C, H, W), dtype=jnp.float32)
    target = jax.random.randint(k2, (B, H, W), 0, C, dtype=jnp.int32)

    out = focal_dice_loss_multi(logits, target)
    out = jax.block_until_ready(out)

    ref = focal_dice_loss_multi_ref(logits, target)
    assert jnp.allclose(out, ref, rtol=1e-5, atol=1e-5), (out, ref)
    print("KERNEL_OK")
</pallas_src>

<mosaic_0001>
module attributes {stable_mosaic.version = 11 : i64} {
  func.func @_focal_dice_kernel(%arg0: i32, %arg1: i32, %arg2: memref<1x4x256xf32, #tpu.memory_space<vmem>>, %arg3: memref<1x1x256xi8, #tpu.memory_space<vmem>>, %arg4: memref<1x8x128xf32, #tpu.memory_space<vmem>>, %arg5: memref<1x256xf32, #tpu.memory_space<vmem>>) attributes {dimension_semantics = [#tpu.dimension_semantics<parallel>, #tpu.dimension_semantics<arbitrary>], iteration_bounds = array<i64: 2, 1>, scalar_prefetch = 0 : i64, scratch_operands = 1 : i64, tpu.core_type = #tpu.core_type<tc>, window_params = [{transform_indices = @transform_0, window_bounds = array<i64: 1, 4, 256>}, {transform_indices = @transform_1, window_bounds = array<i64: 1, 1, 256>}, {transform_indices = @transform_2, window_bounds = array<i64: 1, 8, 128>}]} {
    %c0_i32 = arith.constant 0 : i32
    %0 = arith.cmpi eq, %arg1, %c0_i32 : i32
    %1 = arith.extui %0 : i1 to i32
    %c0_i32_0 = arith.constant 0 : i32
    %2 = arith.cmpi ne, %1, %c0_i32_0 : i32
    scf.if %2 {
      %cst_22 = arith.constant 0.000000e+00 : f32
      %49 = vector.broadcast %cst_22 : f32 to vector<1x256xf32>
      %c0_23 = arith.constant 0 : index
      %c0_24 = arith.constant 0 : index
      %50 = vector.load %arg5[%c0_23, %c0_24] : memref<1x256xf32, #tpu.memory_space<vmem>>, vector<1x256xf32>
      tpu.vector_store %arg5[%c0_23, %c0_24], %49 {strides = array<i32>} : memref<1x256xf32, #tpu.memory_space<vmem>>, vector<1x256xf32>,
    } else {
    }
    %c0 = arith.constant 0 : index
    %c0_1 = arith.constant 0 : index
    %c0_2 = arith.constant 0 : index
    %3 = vector.load %arg2[%c0, %c0_1, %c0_2] : memref<1x4x256xf32, #tpu.memory_space<vmem>>, vector<1x4x256xf32>
    %4 = vector.shape_cast %3 : vector<1x4x256xf32> to vector<4x256xf32>
    %c0_3 = arith.constant 0 : index
    %c0_4 = arith.constant 0 : index
    %c0_5 = arith.constant 0 : index
    %5 = vector.load %arg3[%c0_3, %c0_4, %c0_5] : memref<1x1x256xi8, #tpu.memory_space<vmem>>, vector<1x1x256xi8>
    %6 = vector.shape_cast %5 : vector<1x1x256xi8> to vector<1x256xi8>
    %7 = arith.extsi %6 : vector<1x256xi8> to vector<1x256xi32>
    %cst = arith.constant dense<0xFF800000> : vector<256xf32>
    %8 = vector.multi_reduction <maximumf>, %4, %cst [0] : vector<4x256xf32> to vector<256xf32>
    %9 = vector.shape_cast %8 : vector<256xf32> to vector<1x256xf32>
    %10 = vector.broadcast %9 : vector<1x256xf32> to vector<4x256xf32>
    %11 = arith.subf %4, %10 : vector<4x256xf32>
    %12 = math.exp %11 : vector<4x256xf32>
    %cst_6 = arith.constant dense<0.000000e+00> : vector<256xf32>
    %13 = vector.multi_reduction <add>, %12, %cst_6 [0] : vector<4x256xf32> to vector<256xf32>
    %14 = vector.shape_cast %13 : vector<256xf32> to vector<1x256xf32>
    %15 = tpu.iota {dimensions = array<i32: 0>} : vector<4x256xi32>
    %16 = vector.broadcast %7 : vector<1x256xi32> to vector<4x256xi32>
    %17 = arith.cmpi eq, %15, %16 : vector<4x256xi32>
    %cst_7 = arith.constant 0.000000e+00 : f32
    %18 = vector.broadcast %cst_7 : f32 to vector<4x256xf32>
    %19 = arith.select %17, %12, %18 : vector<4x256xi1>, vector<4x256xf32>
    %cst_8 = arith.constant dense<0.000000e+00> : vector<256xf32>
    %20 = vector.multi_reduction <add>, %19, %cst_8 [0] : vector<4x256xf32> to vector<256xf32>
    %21 = vector.shape_cast %20 : vector<256xf32> to vector<1x256xf32>
    %22 = tpu.reciprocal %14 {approx = true} : vector<1x256xf32> -> vector<1x256xf32>
    %23 = arith.mulf %14, %22 : vector<1x256xf32>
    %cst_9 = arith.constant 2.000000e+00 : f32
    %24 = vector.broadcast %cst_9 : f32 to vector<1x256xf32>
    %25 = arith.subf %24, %23 : vector<1x256xf32>
    %26 = arith.mulf %22, %25 : vector<1x256xf32>
    %27 = arith.mulf %21, %26 : vector<1x256xf32>
    %cst_10 = arith.constant 2.000000e+00 : f32
    %28 = vector.broadcast %cst_10 : f32 to vector<1x256xf32>
    %29 = arith.mulf %28, %27 : vector<1x256xf32>
    %cst_11 = arith.constant 1.000000e+00 : f32
    %30 = vector.broadcast %cst_11 : f32 to vector<1x256xf32>
    %31 = arith.addf %29, %30 : vector<1x256xf32>
    %cst_12 = arith.constant 0.333333343 : f32
    %32 = vector.broadcast %cst_12 : f32 to vector<1x256xf32>
    %33 = arith.mulf %31, %32 : vector<1x256xf32>
    %cst_13 = arith.constant 1.000000e+00 : f32
    %34 = vector.broadcast %cst_13 : f32 to vector<1x256xf32>
    %35 = arith.subf %34, %33 : vector<1x256xf32>
    %cst_14 = arith.constant 0.000000e+00 : f32
    %36 = vector.broadcast %cst_14 : f32 to vector<1x256xf32>
    %37 = arith.subf %36, %35 : vector<1x256xf32>
    %38 = math.exp %37 : vector<1x256xf32>
    %cst_15 = arith.constant 1.000000e+00 : f32
    %39 = vector.broadcast %cst_15 : f32 to vector<1x256xf32>
    %40 = arith.subf %39, %38 : vector<1x256xf32>
    %41 = arith.mulf %40, %40 : vector<1x256xf32>
    %42 = arith.mulf %41, %35 : vector<1x256xf32>
    %c0_16 = arith.constant 0 : index
    %c0_17 = arith.constant 0 : index
    %43 = vector.load %arg5[%c0_16, %c0_17] : memref<1x256xf32, #tpu.memory_space<vmem>>, vector<1x256xf32>
    %44 = arith.addf %43, %42 : vector<1x256xf32>
    %c0_18 = arith.constant 0 : index
    %c0_19 = arith.constant 0 : index
    %45 = vector.load %arg5[%c0_18, %c0_19] : memref<1x256xf32, #tpu.memory_space<vmem>>, vector<1x256xf32>
    tpu.vector_store %arg5[%c0_18, %c0_19], %44 {strides = array<i32>} : memref<1x256xf32, #tpu.memory_space<vmem>>, vector<1x256xf32>,
    %c0_i32_20 = arith.constant 0 : i32
    %46 = arith.cmpi eq, %arg1, %c0_i32_20 : i32
    %47 = arith.extui %46 : i1 to i32
    %c0_i32_21 = arith.constant 0 : i32
    %48 = arith.cmpi ne, %47, %c0_i32_21 : i32
    scf.if %48 {
      %c0_22 = arith.constant 0 : index
      %c0_23 = arith.constant 0 : index
      %49 = vector.load %arg5[%c0_22, %c0_23] : memref<1x256xf32, #tpu.memory_space<vmem>>, vector<1x256xf32>
      %50 = vector.shape_cast %49 : vector<1x256xf32> to vector<1x1x256xf32>
      %cst_24 = arith.constant dense<0.000000e+00> : vector<1xf32>
      %51 = vector.multi_reduction <add>, %50, %cst_24 [1, 2] : vector<1x1x256xf32> to vector<1xf32>
      %52 = vector.shape_cast %51 : vector<1xf32> to vector<1x1x1xf32>
      %53 = vector.extract %52[0, 0, 0] : f32 from vector<1x1x1xf32>
      %54 = vector.broadcast %53 : f32 to vector<1x8x128xf32>
      %c0_25 = arith.constant 0 : index
      %c0_26 = arith.constant 0 : index
      %c0_27 = arith.constant 0 : index
      %55 = vector.load %arg4[%c0_25, %c0_26, %c0_27] : memref<1x8x128xf32, #tpu.memory_space<vmem>>, vector<1x8x128xf32>
      tpu.vector_store %arg4[%c0_25, %c0_26, %c0_27], %54 {strides = array<i32>} : memref<1x8x128xf32, #tpu.memory_space<vmem>>, vector<1x8x128xf32>,
    } else {
    }
    return
  }
  func.func @transform_0(%arg0: i32, %arg1: i32) -> (i32, i32, i32) {
    %c0_i32 = arith.constant 0 : i32
    %c0_i32_0 = arith.constant 0 : i32
    return %arg0, %c0_i32, %arg1 : i32, i32, i32
  }
  func.func @transform_1(%arg0: i32, %arg1: i32) -> (i32, i32, i32) {
    %c0_i32 = arith.constant 0 : i32
    %c0_i32_0 = arith.constant 0 : i32
    return %arg0, %c0_i32, %arg1 : i32, i32, i32
  }
  func.func @transform_2(%arg0: i32, %arg1: i32) -> (i32, i32, i32) {
    %c0_i32 = arith.constant 0 : i32
    %c0_i32_0 = arith.constant 0 : i32
    %c0_i32_1 = arith.constant 0 : i32
    return %arg0, %c0_i32, %c0_i32_0 : i32, i32, i32
  }
}

</mosaic_0001>

<llo_original>
// kernel: tpu_custom_call.1
$region0: #{tpu_custom_call.1}
  #allocation0 [shape = 'u32[]', space=smem, size = 0x4, offset = 0x4, fixed_abs, tag = 'smem constant byte address 0x4 - core index']
  #allocation1 [shape = 'u32[144,128]{1,0:T(1,128)}', space=vmem, size = 0x12000, scoped, tag = 'internal scratch']
  #allocation2 [shape = 'f32[1,256]{1,0:T(1,128)}', space=vmem, size = 0x400, scoped, tag = 'scratch operand']
  %s0 = inlined_call_operand.hbm [shape: f32[2,4,256], index: 0, kind: input, shape index: {}]
  %s1 = inlined_call_operand.vmem [shape: s8[2,1,256], index: 1, kind: input, shape index: {}]
  %s2 = inlined_call_operand.hbm [shape: f32[2,8,128], index: 2, kind: output, shape index: {}]
  %s3 = sld [smem:[#allocation0]]
  $region53: #{tpu_custom_call.1} parent=0
    _
  %s5 = ssub.s32 1, %s3
  %s6 = scalar_select 0, %s5, %s3
  $region1: #{tpu_custom_call.1} parent=0
    #allocation3 [shape = 'u8[8192]{0}', space=vmem, size = 0x2000, scoped, tag = 'input window, operand 0']
    #allocation4 [shape = 's32[2]{0}', space=sflag, size = 0x8, scoped, tag = 'scoped memory for tpu_custom_call.1']
    #allocation5 [shape = 's32[2]{0}', space=sflag, size = 0x8, scoped, tag = 'scoped memory for tpu_custom_call.1']
    #allocation6 [shape = 'u8[8192]{0}', space=vmem, size = 0x2000, scoped, tag = 'output window, operand 0']
    %7 = vsyncpa [#allocation4], 0
    %s8 = scalar_lea.sflag [#allocation4], 1
    %9 = vsyncpa %s8, 0
    %10 = vsyncpa [#allocation5], 0
    %s11 = scalar_lea.sflag [#allocation5], 1
    %12 = vsyncpa %s11, 0
    loop: start=0, step=1, limit=4
    $region2: #{tpu_custom_call.1} parent=1 // loop_pre_header
      _
    $region3: #{tpu_custom_call.1} parent=1 // loop_header
      %s14 = sphi 0, %s18
      %p15 = scmp.ge.s32.totalorder %s14, 4
      %s21 = sphi 0, %s33
      %s22 = sphi 0, %s29
      %s23 = sphi 0, %s21
      %s24 = sphi 0, %s22
      %s25 = sphi 0, %s23
      %s26 = sphi 0, %s24
      %s38 = sphi 0, %s40
      %s41 = sphi 0, %s38
      %s42 = sphi 0, %s41
      %s58 = sphi 0, %s42
      %s66 = sphi 0, %s68
      %s69 = sphi 0, %s66
      %s70 = sphi 0, %s69
      %s86 = sphi 0, %s70
      %s92 = sphi 0, %s94
      %s95 = sphi 0, %s92
      %s96 = sphi 0, %s95
      %s112 = sphi 0, %s96
    $region4: #{tpu_custom_call.1} parent=1 // loop_header_branch
      %17 = sbr.rel (%p15) target = $region8
    $region5: #{tpu_custom_call.1} parent=1 // loop_body
      %s19 = ssub.s32 %s14, 1
      %s20 = ssub.s32 %s14, 2
      %s27 = sadd.s32 1, %s22
      %p28 = scmp.ge.s32.totalorder %s27, 1
      %s29 = scalar_select %p28, 0, %s27
      %s30 = sadd.s32 1, %s21
      %s31 = scalar_select %p28, %s30, %s21
      %p32 = scmp.ge.s32.totalorder %s31, 2
      %s33 = scalar_select %p32, 0, %s31
      %s34 = ssub.s32 %s21, %s33
      %s35 = ssub.s32 %s22, %s29
      %s36 = sor.u32 %s34, %s35
      %p37 = scmp.eq.s32.totalorder %s36, 0
      %s39 = sadd.s32 %s38, 1
      %s40 = scalar_select %p37, %s38, %s39
      %p43 = pneg %p37
      %p44 = scmp.eq.s32.totalorder %s14, 1
      %p45 = por %p43, %p44
      %p46 = scmp.ne.s32.totalorder %s38, %s41
      %p47 = scmp.eq.s32.totalorder %s14, 0
      %p48 = por %p46, %p47
      %p49 = scmp.ne.s32.totalorder %s38, %s41
      %p50 = scmp.eq.s32.totalorder %s19, 1
      %p51 = por %p49, %p50
      %p52 = scmp.ne.s32.totalorder %s41, %s42
      %p53 = scmp.eq.s32.totalorder %s19, 0
      %p54 = por %p52, %p53
      %p55 = scmp.ne.s32.totalorder %s41, %s42
      %p56 = scmp.eq.s32.totalorder %s20, 1
      %p57 = por %p55, %p56
      %p59 = scmp.ne.s32.totalorder %s42, %s58
      %p60 = scmp.eq.s32.totalorder %s20, 0
      %p61 = por %p59, %p60
      %s62 = ssub.s32 %s21, %s33
      %s63 = ssub.s32 %s22, %s29
      %s64 = sor.u32 %s62, %s63
      %p65 = scmp.eq.s32.totalorder %s64, 0
      %s67 = sadd.s32 %s66, 1
      %s68 = scalar_select %p65, %s66, %s67
      %p71 = pneg %p65
      %p72 = scmp.eq.s32.totalorder %s14, 1
      %p73 = por %p71, %p72
      %p74 = scmp.ne.s32.totalorder %s66, %s69
      %p75 = scmp.eq.s32.totalorder %s14, 0
      %p76 = por %p74, %p75
      %p77 = scmp.ne.s32.totalorder %s66, %s69
      %p78 = scmp.eq.s32.totalorder %s19, 1
      %p79 = por %p77, %p78
      %p80 = scmp.ne.s32.totalorder %s69, %s70
      %p81 = scmp.eq.s32.totalorder %s19, 0
      %p82 = por %p80, %p81
      %p83 = scmp.ne.s32.totalorder %s69, %s70
      %p84 = scmp.eq.s32.totalorder %s20, 1
      %p85 = por %p83, %p84
      %p87 = scmp.ne.s32.totalorder %s70, %s86
      %p88 = scmp.eq.s32.totalorder %s20, 0
      %p89 = por %p87, %p88
      %s90 = ssub.s32 %s21, %s33
      %p91 = scmp.eq.s32.totalorder %s90, 0
      %s93 = sadd.s32 %s92, 1
      %s94 = scalar_select %p91, %s92, %s93
      %p97 = pneg %p91
      %p98 = scmp.eq.s32.totalorder %s14, 1
      %p99 = por %p97, %p98
      %p100 = scmp.ne.s32.totalorder %s92, %s95
      %p101 = scmp.eq.s32.totalorder %s14, 0
      %p102 = por %p100, %p101
      %p103 = scmp.ne.s32.totalorder %s92, %s95
      %p104 = scmp.eq.s32.totalorder %s19, 1
      %p105 = por %p103, %p104
      %p106 = scmp.ne.s32.totalorder %s95, %s96
      %p107 = scmp.eq.s32.totalorder %s19, 0
      %p108 = por %p106, %p107
      %p109 = scmp.ne.s32.totalorder %s95, %s96
      %p110 = scmp.eq.s32.totalorder %s20, 1
      %p111 = por %p109, %p110
      %p113 = scmp.ne.s32.totalorder %s96, %s112
      %p114 = scmp.eq.s32.totalorder %s20, 0
      %p115 = por %p113, %p114
      %p116 = scmp.le.s32.totalorder 1, %s14
      %p117 = scmp.lt.s32.totalorder %s14, 3
      %p118 = pnand %p116, %p117
      %p119 = pneg %p118
      // Predicated region
      $region9: #{tpu_custom_call.1} parent=5 // pred_check
        _
      $region10: #{tpu_custom_call.1} parent=5 // pred_check_branch
        %121 = sbr.rel (%p118) target = $region12
      $region11: #{tpu_custom_call.1} parent=5 // pred_region
        %s122 = ssub.s32 %s14, 1
      $region12: #{tpu_custom_call.1} parent=5 // pred_fallthru
        _
      %p123 = scmp.lt.s32.totalorder %s14, 2
      // Predicated region
      $region13: #{tpu_custom_call.1} parent=5 // pred_check
        %p124 = pneg %p123
      $region14: #{tpu_custom_call.1} parent=5 // pred_check_branch
        %126 = sbr.rel (%p124) target = $region16
      $region15: #{tpu_custom_call.1} parent=5 // pred_region
        // Predicated region
        $region17: #{tpu_custom_call.1} parent=15 // pred_check
          %p127 = pneg %p48
        $region18: #{tpu_custom_call.1} parent=15 // pred_check_branch
          %129 = sbr.rel (%p127) target = $region20
        $region19: #{tpu_custom_call.1} parent=15 // pred_region
          %s130 = sand.u32 %s38, 1
          %s131 = scalar_lea.sflag [#allocation4], %s130
          %s132 = sand.u32 %s38, 1
          %s133 = smul.addr %s132, 8
          %s134 = scalar_lea.vmem [#allocation3], %s133
          %s135 = smul.u32 2, %s22
          %s137 = ssub.s32 128, 128
          %138 = vsyncadd %s131, %s137
          %s139 = smul.addr %s21, 2
          %s140 = sadd.s32 %s135, %s139
          %s141 = smul.addr %s140, 64
          %s142 = scalar_lea.hbm %s0, %s141
          %s144 = sshll.u32 %s134, 4
          %s145 = int_to_ptr.vmem [resolvable:$true] %s144
          %147 = dma.hbm_to_vmem [thread:$0]  %s142, 128, %s145, %s131
        $region20: #{tpu_custom_call.1} parent=15 // pred_fallthru
          _
        // Predicated region
        $region21: #{tpu_custom_call.1} parent=15 // pred_check
          %p148 = pneg %p76
        $region22: #{tpu_custom_call.1} parent=15 // pred_check_branch
          %150 = sbr.rel (%p148) target = $region24
        $region23: #{tpu_custom_call.1} parent=15 // pred_region
          %s151 = smul.u32 2, %s22
          %p152 = scmp.lt.s32.totalorder %s21, 1
          %s153 = scalar_select %p152, %s21, 1
          %p154 = scmp.lt.s32.totalorder %s151, 1
          %s155 = scalar_select %p154, %s151, 1
          %s156 = smul.addr %s153, 2
          %s157 = sadd.s32 %s155, %s156
          %s158 = scalar_lea.vmem %s1, %s157
          %s159 = smul.u32 2, %s22
        $region24: #{tpu_custom_call.1} parent=15 // pred_fallthru
          _
      $region16: #{tpu_custom_call.1} parent=5 // pred_fallthru
        _
      %p160 = scmp.le.s32.totalorder 1, %s14
      %p161 = scmp.lt.s32.totalorder %s14, 3
      %p162 = pnand %p160, %p161
      %p163 = pneg %p162
      // Predicated region
      $region25: #{tpu_custom_call.1} parent=5 // pred_check
        _
      $region26: #{tpu_custom_call.1} parent=5 // pred_check_branch
        %165 = sbr.rel (%p162) target = $region28
      $region27: #{tpu_custom_call.1} parent=5 // pred_region
        %s166 = ssub.s32 %s14, 1
        %s167 = sand.u32 %s41, 1
        %s168 = scalar_lea.sflag [#allocation4], %s167
        %s169 = sand.u32 %s41, 1
        %s170 = smul.addr %s169, 8
        %s171 = scalar_lea.vmem [#allocation3], %s170
        // Predicated region
        $region29: #{tpu_custom_call.1} parent=27 // pred_check
          %p172 = pneg %p54
        $region30: #{tpu_custom_call.1} parent=27 // pred_check_branch
          %174 = sbr.rel (%p172) target = $region32
        $region31: #{tpu_custom_call.1} parent=27 // pred_region
          %175 = dma.done %s168, 128
        $region32: #{tpu_custom_call.1} parent=27 // pred_fallthru
          _
        %s176 = sand.u32 %s41, 1
        %s177 = scalar_lea.sflag [#allocation4], %s176
        %s178 = sand.u32 %s41, 1
        %s179 = smul.addr %s178, 8
        %s180 = scalar_lea.vmem [#allocation3], %s179
        %p181 = pneg %p54
        %p182 = pneg %p51
        %s183 = smul.u32 2, %s24
        %p184 = scmp.lt.s32.totalorder %s23, 1
        %s185 = scalar_select %p184, %s23, 1
        %p186 = scmp.lt.s32.totalorder %s183, 1
        %s187 = scalar_select %p186, %s183, 1
        %s188 = smul.addr %s185, 2
        %s189 = sadd.s32 %s187, %s188
        %s190 = scalar_lea.vmem %s1, %s189
        %p191 = pneg %p82
        %p192 = pneg %p79
        %p193 = pneg %p108
        %p194 = pneg %p105
        %s195 = sand.u32 %s95, 1
        %s196 = scalar_lea.sflag [#allocation5], %s195
        %s197 = sand.u32 %s95, 1
        %s198 = smul.addr %s197, 8
        %s199 = scalar_lea.vmem [#allocation6], %s198
        %s200 = smul.u32 2, %s24
        %s201 = smul.u32 2, %s24
        %p202 = scmp.lt.s32.totalorder %s23, 1
        %s203 = scalar_select %p202, %s23, 1
        %p204 = scmp.lt.s32.totalorder %s201, 1
        %s205 = scalar_select %p204, %s201, 1
        %s206 = smul.addr %s203, 2
        %s207 = sadd.s32 %s205, %s206
        %s208 = scalar_lea.vmem %s1, %s207
        %s209 = smul.u32 2, %s24
        %p210 = scmp.eq.s32.totalorder %s24, 0
        // Predicated region
        $region33: #{tpu_custom_call.1} parent=27 // pred_check
          %p211 = pneg %p210
        $region34: #{tpu_custom_call.1} parent=27 // pred_check_branch
          %213 = sbr.rel (%p211) target = $region36
        $region35: #{tpu_custom_call.1} parent=27 // pred_region
          %v214 = vlaneseq
          %vm215 = vcmp.ge.s32.totalorder %v214, 0
          %vm216 = vcmp.lt.s32.totalorder %v214, 256
          %vm217 = vmand %vm215, %vm216
          %218 = vst.msk [vmem:[#allocation2] sm:$0x3] %vm217, 0.0
        $region36: #{tpu_custom_call.1} parent=27 // pred_fallthru
          _
        %v219 = vld [vmem:[%s171] sm:$0xff]
        %v220 = vld [vmem:[%s208] sm:$0x3]
        %v221 = vunpack.c.0.s8 %v220
        %v223 = vcombine.high %v219, %v219
        %vm225 = vcmask 1043456
        %v226 = vsel %vm225, %v219, -inf
        %v227 = vrot.slane %v226, 4
        %v228 = vmax.f32 %v226, %v227
        %v229 = vrot.slane %v228, 2
        %v230 = vmax.f32 %v228, %v229
        %v231 = vrot.slane %v230, 1
        %v232 = vmax.f32 %v230, %v231
        %v233 = vsel %vm225, %v223, -inf
        %v234 = vrot.slane %v233, 4
        %v235 = vmax.f32 %v233, %v234
        %v236 = vrot.slane %v235, 2
        %v237 = vmax.f32 %v235, %v236
        %v238 = vrot.slane %v237, 1
        %v239 = vmax.f32 %v237, %v238
        %v242 = vcombine.low %v232, %v239
        %v244 = vsub.f32 %v219, %v242
        %v245 = vmul.f32 %v244, 1.442695
        %v246 = vpow.pop %v245
        %v248 = vcombine.high %v246, %v246
        %v250 = vsel %vm225, %v246, 0.0
        %v251 = vrot.slane %v250, 4
        %v252 = vadd.f32 %v250, %v251
        %v253 = vrot.slane %v252, 2
        %v254 = vadd.f32 %v252, %v253
        %v255 = vrot.slane %v254, 1
        %v256 = vadd.f32 %v254, %v255
        %v257 = vsel %vm225, %v248, 0.0
        %v258 = vrot.slane %v257, 4
        %v259 = vadd.f32 %v257, %v258
        %v260 = vrot.slane %v259, 2
        %v261 = vadd.f32 %v259, %v260
        %v262 = vrot.slane %v261, 1
        %v263 = vadd.f32 %v261, %v262
        %v264 = vlaneseq
        %v265 = vshrl.u32 %v264, 7
        %v266 = vlaneseq
        %v267 = vshrl.u32 %v266, 7
        %v268 = vsub.s32 0, %v267
        %v269 = vrot.slane %v221, %v268
        %v270 = vlaneseq
        %v271 = vshrl.u32 %v270, 7
        %v272 = vsub.s32 4, %v271
        %v273 = vrot.slane %v221, %v272
        %v274 = vlaneseq
        %v275 = vshrl.u32 %v274, 7
        %v276 = vsub.s32 0, %v275
        %v277 = vrot.slane %v269, %v276
        %v278 = vlaneseq
        %v279 = vshrl.u32 %v278, 7
        %v280 = vsub.s32 0, %v279
        %v281 = vrot.slane %v273, %v280
        %vm282 = vcmp.eq.s32.totalorder %v265, %v277
        %vm283 = vcmp.eq.s32.totalorder %v265, %v281
        %v284 = vsel %vm282, %v246, 0.0
        %v285 = vsel %vm283, %v248, 0.0
        %v286 = vsel %vm225, %v284, 0.0
        %v287 = vrot.slane %v286, 4
        %v288 = vadd.f32 %v286, %v287
        %v289 = vrot.slane %v288, 2
        %v290 = vadd.f32 %v288, %v289
        %v291 = vrot.slane %v290, 1
        %v292 = vadd.f32 %v290, %v291
        %v293 = vsel %vm225, %v285, 0.0
        %v294 = vrot.slane %v293, 4
        %v295 = vadd.f32 %v293, %v294
        %v296 = vrot.slane %v295, 2
        %v297 = vadd.f32 %v295, %v296
        %v298 = vrot.slane %v297, 1
        %v299 = vadd.f32 %v297, %v298
        %v300 = vrcp.pop %v256
        %v301 = vrcp.pop %v263
        %v302 = vmul.f32 %v256, %v300
        %v303 = vmul.f32 %v263, %v301
        %v304 = vsub.f32 2.0, %v302
        %v305 = vsub.f32 2.0, %v303
        %v306 = vmul.f32 %v300, %v304
        %v307 = vmul.f32 %v301, %v305
        %v308 = vmul.f32 %v292, %v306
        %v309 = vmul.f32 %v299, %v307
        %v310 = vmul.f32 %v308, 2.0
        %v311 = vmul.f32 %v309, 2.0
        %v312 = vadd.f32 %v310, 1.0
        %v313 = vadd.f32 %v311, 1.0
        %v314 = vmul.f32 %v312, 0.33333334
        %v315 = vmul.f32 %v313, 0.33333334
        %v316 = vsub.f32 1.0, %v314
        %v317 = vsub.f32 1.0, %v315
        %v318 = vsub.f32 0.0, %v316
        %v319 = vsub.f32 0.0, %v317
        %v320 = vmul.f32 %v318, 1.442695
        %v321 = vpow.pop %v320
        %v322 = vmul.f32 %v319, 1.442695
        %v323 = vpow.pop %v322
        %v324 = vsub.f32 1.0, %v321
        %v325 = vsub.f32 1.0, %v323
        %v326 = vmul.f32 %v324, %v324
        %v327 = vmul.f32 %v325, %v325
        %v328 = vmul.f32 %v326, %v316
        %v329 = vmul.f32 %v327, %v317
        %v330 = vld [vmem:[#allocation2] sm:$0x3]
        %v333 = vcombine.low %v328, %v329
        %v335 = vunpack.c.l.s4 1966171168
        %v336 = vunpack.c.0.s8 %v335
        %v337 = vlaneseq
        %v338 = vshrl.u32 %v337, 7
        %v339 = vsub.s32 %v336, %v338
        %v340 = vrot.slane %v333, %v339
        %v342 = vunpack.c.l.s4 1966171168
        %v343 = vunpack.c.0.s8 %v342
        %v344 = vlaneseq
        %v345 = vshrl.u32 %v344, 7
        %v346 = vsub.s32 %v343, %v345
        %v347 = vrot.slane %v340, %v346
        %v349 = vadd.f32 %v330, %v347
        %v350 = vlaneseq
        %vm351 = vcmp.ge.s32.totalorder %v350, 0
        %vm352 = vcmp.lt.s32.totalorder %v350, 256
        %vm353 = vmand %vm351, %vm352
        %354 = vst.msk [vmem:[#allocation2] sm:$0x3] %vm353, %v349
        // Predicated region
        $region37: #{tpu_custom_call.1} parent=27 // pred_check
          %p355 = pneg %p210
        $region38: #{tpu_custom_call.1} parent=27 // pred_check_branch
          %357 = sbr.rel (%p355) target = $region40
        $region39: #{tpu_custom_call.1} parent=27 // pred_region
          %v358 = vld [vmem:[#allocation2] sm:$0x3]
          %v360 = vlaneseq
          %v361 = vshrl.u32 %v360, 7
          %v362 = vsub.s32 0, %v361
          %v363 = vrot.slane %v358, %v362
          %v364 = vlaneseq
          %v365 = vshrl.u32 %v364, 7
          %v366 = vsub.s32 1, %v365
          %v367 = vrot.slane %v358, %v366
          %vm370 = vcmask 1040384
          %v371 = vsel %vm370, %v363, 0.0
          %v372 = vsel %vm370, %v367, 0.0
          %v373 = vadd.f32 %v371, %v372
          %374 = vadd.xlane.f32.xlu0 %v373
          %v375 = vpop.xlane.xlu0 %374
          %v376 = vrot.slane %v375, 4
          %v377 = vadd.f32 %v375, %v376
          %v378 = vrot.slane %v377, 2
          %v379 = vadd.f32 %v377, %v378
          %v380 = vrot.slane %v379, 1
          %v381 = vadd.f32 %v379, %v380
          %s382 = vtos %v381
          %v383 = vstv %s382
          %384 = vst [vmem:[%s199] sm:$0xff] %v383
        $region40: #{tpu_custom_call.1} parent=27 // pred_fallthru
          _
        %s385 = sand.u32 %s95, 1
        %s386 = scalar_lea.sflag [#allocation5], %s385
        %s387 = sand.u32 %s95, 1
        %s388 = smul.addr %s387, 8
        %s389 = scalar_lea.vmem [#allocation6], %s388
        // Predicated region
        $region41: #{tpu_custom_call.1} parent=27 // pred_check
          %p390 = pneg %p105
        $region42: #{tpu_custom_call.1} parent=27 // pred_check_branch
          %392 = sbr.rel (%p390) target = $region44
        $region43: #{tpu_custom_call.1} parent=27 // pred_region
          %s394 = ssub.s32 128, 128
          %395 = vsyncadd %s386, %s394
          %s396 = smul.addr %s23, 128
          %s397 = scalar_lea.hbm %s2, %s396
          %s399 = sshll.u32 %s389, 4
          %s400 = int_to_ptr.vmem [resolvable:$true] %s399
          %402 = dma.vmem_to_hbm [thread:$0]  %s400, 128, %s397, %s386
        $region44: #{tpu_custom_call.1} parent=27 // pred_fallthru
          _
      $region28: #{tpu_custom_call.1} parent=5 // pred_fallthru
        _
      %p403 = scmp.le.s32.totalorder 2, %s14
      // Predicated region
      $region45: #{tpu_custom_call.1} parent=5 // pred_check
        %p404 = pneg %p403
      $region46: #{tpu_custom_call.1} parent=5 // pred_check_branch
        %406 = sbr.rel (%p404) target = $region48
      $region47: #{tpu_custom_call.1} parent=5 // pred_region
        %s407 = ssub.s32 %s14, 2
        // Predicated region
        $region49: #{tpu_custom_call.1} parent=47 // pred_check
          %p408 = pneg %p111
        $region50: #{tpu_custom_call.1} parent=47 // pred_check_branch
          %410 = sbr.rel (%p408) target = $region52
        $region51: #{tpu_custom_call.1} parent=47 // pred_region
          %s411 = sand.u32 %s96, 1
          %s412 = scalar_lea.sflag [#allocation5], %s411
          %s413 = sand.u32 %s96, 1
          %s414 = smul.addr %s413, 8
          %s415 = scalar_lea.vmem [#allocation6], %s414
          %416 = dma.done %s412, 128
        $region52: #{tpu_custom_call.1} parent=47 // pred_fallthru
          _
      $region48: #{tpu_custom_call.1} parent=5 // pred_fallthru
        _
    $region6: #{tpu_custom_call.1} parent=1 // loop_footer
      %s18 = sadd.s32 1, %s14
    $region7: #{tpu_custom_call.1} parent=1 // loop_footer_branch
      %13 = sbr.rel target = $region3
    $region8: #{tpu_custom_call.1} parent=1 // loop_exit
      _
    %417 = vsyncpa [#allocation4], 1
    %s418 = scalar_lea.sflag [#allocation4], 1
    %419 = vsyncpa %s418, 1
    %420 = vsyncpa [#allocation5], 1
    %s421 = scalar_lea.sflag [#allocation5], 1
    %422 = vsyncpa %s421, 1

</llo_original>
